<compile_context>
chip_gen: v5e
topology: v5e:2x2
jax: 0.10.0
libtpu: 0.0.40
codegen_flags: <defaults>
</compile_context>

<pallas_src>
import math

import jax
import jax.numpy as jnp
from jax import lax
from jax.experimental import pallas as pl
from jax.experimental.pallas import tpu as pltpu


def _fused_deconv_gemm_kernel(w_ref, x_ref, o_ref):
    # w_ref: (R, Cin)       fused, pre-scaled weight, R = kH*kW*Cout (resident)
    # x_ref: (1, Cin, t_hw) spatial tile of one image, channels on sublanes
    # o_ref: (1, R, t_hw)   all-tap outputs for this tile (lane-dense stores)
    o_ref[0] = jnp.dot(
        w_ref[...], x_ref[0], preferred_element_type=jnp.float32
    ).astype(o_ref.dtype)


def equalized_deconv2d(x, weight, bias, stride=1, padding=0):
    """Forward of EqualizedDeconv2d (== conv_transpose2d(x, weight*scale, bias)).

    x:      (N, Cin, H, W)        float32, NCHW
    weight: (Cin, Cout, kH, kW)   float32 (unscaled, like the torch Parameter)
    bias:   (Cout,)               float32
    """
    N, Cin, H, W = x.shape
    Cin_w, Cout, kH, kW = weight.shape
    assert Cin == Cin_w
    s = int(stride)
    pad = int(padding)

    # Equalized learning-rate scale (fan_in = in_channels, as in the module).
    scale = math.sqrt(2.0) / math.sqrt(Cin)

    # Fused weight: one GEMM covers every kernel tap.
    # W_fused[(p*kW + q)*Cout + c, cin] = scale * weight[cin, c, p, q]
    R = kH * kW * Cout
    w_fused = jnp.transpose(weight * scale, (2, 3, 1, 0)).reshape(R, Cin)

    # Input stays NCHW; flattening the spatial dims is a free reshape.
    HW = H * W
    x3 = x.reshape(N, Cin, HW)

    # Spatial tile: as large as a conservative VMEM budget allows
    # (double-buffered input + output tiles in f32), capped at 2048 lanes.
    vmem_budget = 24 * 1024 * 1024
    bytes_per_lane = 2 * 4 * (R + Cin)  # 2 buffers x f32 x (out rows + in rows)
    t_hw = max(128, min(2048, (vmem_budget // bytes_per_lane) // 128 * 128))
    t_hw = min(t_hw, pl.cdiv(HW, 128) * 128)  # don't exceed (padded) H*W
    HW_pad = pl.cdiv(HW, t_hw) * t_hw
    if HW_pad != HW:
        x3 = jnp.pad(x3, ((0, 0), (0, 0), (0, HW_pad - HW)))

    y = pl.pallas_call(
        _fused_deconv_gemm_kernel,
        out_shape=jax.ShapeDtypeStruct((N, R, HW_pad), x.dtype),
        grid_spec=pltpu.PrefetchScalarGridSpec(
            num_scalar_prefetch=0,
            grid=(N, HW_pad // t_hw),
            in_specs=[
                pl.BlockSpec((R, Cin), lambda n, j: (0, 0)),       # resident weight
                pl.BlockSpec((1, Cin, t_hw), lambda n, j: (n, 0, j)),
            ],
            out_specs=pl.BlockSpec((1, R, t_hw), lambda n, j: (n, 0, j)),
        ),
        compiler_params=pltpu.CompilerParams(
            dimension_semantics=("parallel", "parallel"),
            vmem_limit_bytes=32 * 1024 * 1024,
        ),
    )(w_fused, x3)

    # (N, kH, kW, Cout, H, W): per-tap contributions, already channel-major.
    y6 = y[:, :, :HW].reshape(N, kH, kW, Cout, H, W)

    # Scatter onto the dilated output grid, grouped by stride residue class.
    Hfull = (H - 1) * s + kH
    Wfull = (W - 1) * s + kW
    bias4 = bias[None, :, None, None]
    # Initialize with bias so sublattices untouched by any tap (only possible
    # when stride > kernel) still get the bias; covered sublattices are .set.
    out_full = jnp.broadcast_to(bias4, (N, Cout, Hfull, Wfull)).astype(x.dtype)
    for rp in range(s):
        for rq in range(s):
            ps = range(rp, kH, s)
            qs = range(rq, kW, s)
            Kp, Kq = len(ps), len(qs)
            if Kp == 0 or Kq == 0:
                continue
            buf = jnp.zeros((N, Cout, H + Kp - 1, W + Kq - 1), x.dtype)
            for a, p in enumerate(ps):
                for b, q in enumerate(qs):
                    buf = buf.at[:, :, a:a + H, b:b + W].add(y6[:, p, q])
            # Disjoint sublattice: single strided write, bias folded in.
            out_full = out_full.at[:, :, rp::s, rq::s].set(buf + bias4)

    # Crop by `padding` (conv_transpose2d semantics); already NCHW.
    return out_full[:, :, pad:Hfull - pad, pad:Wfull - pad]


def _reference_deconv(x, weight, bias, stride, padding):
    """Pure-JAX reference equal to torch.nn.functional.conv_transpose2d."""
    Cin, Cout, kH, kW = weight.shape
    scale = math.sqrt(2.0) / math.sqrt(Cin)
    w = jnp.flip(weight * scale, (2, 3)).transpose(1, 0, 2, 3)  # OIHW
    out = lax.conv_general_dilated(
        x,
        w,
        window_strides=(1, 1),
        padding=[(kH - 1 - padding, kH - 1 - padding),
                 (kW - 1 - padding, kW - 1 - padding)],
        lhs_dilation=(stride, stride),
        dimension_numbers=("NCHW", "OIHW", "NCHW"),
    )
    return out + bias[None, :, None, None]


if __name__ == "__main__":
    # Module config: EqualizedDeconv2d(in_channels=4, out_channels=8,
    #                                  kernel_size=4, stride=2, padding=1)
    in_channels, out_channels, kernel_size, stride, padding = 4, 8, 4, 2, 1
    N, H, W = 2, 16, 16

    key = jax.random.PRNGKey(0)
    kx, kw, kb = jax.random.split(key, 3)
    x = jax.random.normal(kx, (N, in_channels, H, W), dtype=jnp.float32)
    weight = jax.random.normal(
        kw, (in_channels, out_channels, kernel_size, kernel_size), dtype=jnp.float32
    )
    # torch init is zeros; use a small nonzero bias to exercise the folded bias path.
    bias = 0.1 * jax.random.normal(kb, (out_channels,), dtype=jnp.float32)

    fwd = jax.jit(
        lambda x, w, b: equalized_deconv2d(x, w, b, stride=stride, padding=padding)
    )
    out = jax.block_until_ready(fwd(x, weight, bias))

    ref = _reference_deconv(x, weight, bias, stride, padding)
    expected_shape = (
        N,
        out_channels,
        (H - 1) * stride - 2 * padding + kernel_size,
        (W - 1) * stride - 2 * padding + kernel_size,
    )
    assert out.shape == expected_shape, out.shape
    assert jnp.allclose(out, ref, atol=1e-4, rtol=1e-4), float(
        jnp.max(jnp.abs(out - ref))
    )

    print("KERNEL_OK")
</pallas_src>

<mosaic_0001>
module attributes {stable_mosaic.version = 11 : i64} {
  func.func @_fused_deconv_gemm_kernel(%arg0: i32, %arg1: i32, %arg2: memref<128x4xf32, #tpu.memory_space<vmem>>, %arg3: memref<1x4x256xf32, #tpu.memory_space<vmem>>, %arg4: memref<1x128x256xf32, #tpu.memory_space<vmem>>) attributes {dimension_semantics = [#tpu.dimension_semantics<parallel>, #tpu.dimension_semantics<parallel>], iteration_bounds = array<i64: 2, 1>, scalar_prefetch = 0 : i64, scratch_operands = 0 : i64, tpu.core_type = #tpu.core_type<tc>, window_params = [{pipeline_mode = #tpu.pipeline_mode<synchronous>, transform_indices = @transform_0, window_bounds = array<i64: 128, 4>}, {transform_indices = @transform_1, window_bounds = array<i64: 1, 4, 256>}, {transform_indices = @transform_2, window_bounds = array<i64: 1, 128, 256>}]} {
    %c0 = arith.constant 0 : index
    %c0_0 = arith.constant 0 : index
    %0 = vector.load %arg2[%c0, %c0_0] : memref<128x4xf32, #tpu.memory_space<vmem>>, vector<128x4xf32>
    %c0_1 = arith.constant 0 : index
    %c0_2 = arith.constant 0 : index
    %c0_3 = arith.constant 0 : index
    %1 = vector.load %arg3[%c0_1, %c0_2, %c0_3] : memref<1x4x256xf32, #tpu.memory_space<vmem>>, vector<1x4x256xf32>
    %2 = vector.shape_cast %1 : vector<1x4x256xf32> to vector<4x256xf32>
    %cst = arith.constant dense<0.000000e+00> : vector<128x256xf32>
    %3 = tpu.matmul %0, %2, %cst {dimension_numbers = #tpu.dot_dimension_numbers<[1], [0], [0], [1], [0, 0, 1, 1], [], []>} : vector<128x4xf32>, vector<4x256xf32>, vector<128x256xf32> -> vector<128x256xf32>
    %c0_4 = arith.constant 0 : index
    %c0_5 = arith.constant 0 : index
    %c0_6 = arith.constant 0 : index
    %4 = vector.load %arg4[%c0_4, %c0_5, %c0_6] : memref<1x128x256xf32, #tpu.memory_space<vmem>>, vector<1x128x256xf32>
    %5 = vector.shape_cast %4 : vector<1x128x256xf32> to vector<128x256xf32>
    %6 = vector.shape_cast %3 : vector<128x256xf32> to vector<1x128x256xf32>
    tpu.vector_store %arg4[%c0_4, %c0_5, %c0_6], %6 {strides = array<i32>} : memref<1x128x256xf32, #tpu.memory_space<vmem>>, vector<1x128x256xf32>,
    return
  }
  func.func @transform_0(%arg0: i32, %arg1: i32) -> (i32, i32) {
    %c0_i32 = arith.constant 0 : i32
    %c0_i32_0 = arith.constant 0 : i32
    %c0_i32_1 = arith.constant 0 : i32
    return %c0_i32, %c0_i32_0 : i32, i32
  }
  func.func @transform_1(%arg0: i32, %arg1: i32) -> (i32, i32, i32) {
    %c0_i32 = arith.constant 0 : i32
    %c0_i32_0 = arith.constant 0 : i32
    return %arg0, %c0_i32, %arg1 : i32, i32, i32
  }
  func.func @transform_2(%arg0: i32, %arg1: i32) -> (i32, i32, i32) {
    %c0_i32 = arith.constant 0 : i32
    %c0_i32_0 = arith.constant 0 : i32
    return %arg0, %c0_i32, %arg1 : i32, i32, i32
  }
}

</mosaic_0001>

<llo_original>
// kernel: _lambda_.1
$region0: #{_lambda_.1}
  #allocation0 [shape = 'u32[]', space=smem, size = 0x4, offset = 0x4, fixed_abs, tag = 'smem constant byte address 0x4 - core index']
  #allocation1 [shape = 'u32[72,128]{1,0:T(1,128)}', space=vmem, size = 0x9000, scoped, tag = 'internal scratch']
  %s0 = inlined_call_operand.vmem [shape: f32[128,4], index: 0, kind: input, shape index: {}]
  %s1 = inlined_call_operand.vmem [shape: f32[2,4,256], index: 1, kind: input, shape index: {}]
  %s2 = inlined_call_operand.vmem [shape: f32[2,128,256], index: 2, kind: output, shape index: {}]
  %s3 = sld [smem:[#allocation0]]
  $region41: #{_lambda_.1} parent=0
    _
  %s5 = ssub.s32 1, %s3
  %s6 = scalar_select 0, %s5, %s3
  loop: start=0, step=1, limit=4
  $region2: #{_lambda_.1} parent=0 // loop_pre_header
    _
  $region3: #{_lambda_.1} parent=0 // loop_header
    %s8 = sphi 0, %s12
    %p9 = scmp.ge.s32.totalorder %s8, 4
    %s15 = sphi 0, %s27
    %s16 = sphi 0, %s23
    %s17 = sphi 0, %s15
    %s18 = sphi 0, %s16
    %s19 = sphi 0, %s17
    %s20 = sphi 0, %s18
    %s28 = sphi 0, %s28
    %s30 = sphi 0, %s28
    %s31 = sphi 0, %s30
    %s45 = sphi 0, %s31
    %s53 = sphi 0, %s55
    %s56 = sphi 0, %s53
    %s57 = sphi 0, %s56
    %s73 = sphi 0, %s57
    %s81 = sphi 0, %s83
    %s84 = sphi 0, %s81
    %s85 = sphi 0, %s84
    %s101 = sphi 0, %s85
  $region4: #{_lambda_.1} parent=0 // loop_header_branch
    %11 = sbr.rel (%p9) target = $region8
  $region5: #{_lambda_.1} parent=0 // loop_body
    %s13 = ssub.s32 %s8, 1
    %s14 = ssub.s32 %s8, 2
    %s21 = sadd.s32 1, %s16
    %p22 = scmp.ge.s32.totalorder %s21, 1
    %s23 = scalar_select %p22, 0, %s21
    %s24 = sadd.s32 1, %s15
    %s25 = scalar_select %p22, %s24, %s15
    %p26 = scmp.ge.s32.totalorder %s25, 2
    %s27 = scalar_select %p26, 0, %s25
    %s29 = sadd.s32 %s28, 1
    %p32 = scmp.eq.s32.totalorder %s8, 1
    %p33 = scmp.ne.s32.totalorder %s28, %s30
    %p34 = scmp.eq.s32.totalorder %s8, 0
    %p35 = por %p33, %p34
    %p36 = scmp.ne.s32.totalorder %s28, %s30
    %p37 = scmp.eq.s32.totalorder %s13, 1
    %p38 = por %p36, %p37
    %p39 = scmp.ne.s32.totalorder %s30, %s31
    %p40 = scmp.eq.s32.totalorder %s13, 0
    %p41 = por %p39, %p40
    %p42 = scmp.ne.s32.totalorder %s30, %s31
    %p43 = scmp.eq.s32.totalorder %s14, 1
    %p44 = por %p42, %p43
    %p46 = scmp.ne.s32.totalorder %s31, %s45
    %p47 = scmp.eq.s32.totalorder %s14, 0
    %p48 = por %p46, %p47
    %s49 = ssub.s32 %s15, %s27
    %s50 = ssub.s32 %s16, %s23
    %s51 = sor.u32 %s49, %s50
    %p52 = scmp.eq.s32.totalorder %s51, 0
    %s54 = sadd.s32 %s53, 1
    %s55 = scalar_select %p52, %s53, %s54
    %p58 = pneg %p52
    %p59 = scmp.eq.s32.totalorder %s8, 1
    %p60 = por %p58, %p59
    %p61 = scmp.ne.s32.totalorder %s53, %s56
    %p62 = scmp.eq.s32.totalorder %s8, 0
    %p63 = por %p61, %p62
    %p64 = scmp.ne.s32.totalorder %s53, %s56
    %p65 = scmp.eq.s32.totalorder %s13, 1
    %p66 = por %p64, %p65
    %p67 = scmp.ne.s32.totalorder %s56, %s57
    %p68 = scmp.eq.s32.totalorder %s13, 0
    %p69 = por %p67, %p68
    %p70 = scmp.ne.s32.totalorder %s56, %s57
    %p71 = scmp.eq.s32.totalorder %s14, 1
    %p72 = por %p70, %p71
    %p74 = scmp.ne.s32.totalorder %s57, %s73
    %p75 = scmp.eq.s32.totalorder %s14, 0
    %p76 = por %p74, %p75
    %s77 = ssub.s32 %s15, %s27
    %s78 = ssub.s32 %s16, %s23
    %s79 = sor.u32 %s77, %s78
    %p80 = scmp.eq.s32.totalorder %s79, 0
    %s82 = sadd.s32 %s81, 1
    %s83 = scalar_select %p80, %s81, %s82
    %p86 = pneg %p80
    %p87 = scmp.eq.s32.totalorder %s8, 1
    %p88 = por %p86, %p87
    %p89 = scmp.ne.s32.totalorder %s81, %s84
    %p90 = scmp.eq.s32.totalorder %s8, 0
    %p91 = por %p89, %p90
    %p92 = scmp.ne.s32.totalorder %s81, %s84
    %p93 = scmp.eq.s32.totalorder %s13, 1
    %p94 = por %p92, %p93
    %p95 = scmp.ne.s32.totalorder %s84, %s85
    %p96 = scmp.eq.s32.totalorder %s13, 0
    %p97 = por %p95, %p96
    %p98 = scmp.ne.s32.totalorder %s84, %s85
    %p99 = scmp.eq.s32.totalorder %s14, 1
    %p100 = por %p98, %p99
    %p102 = scmp.ne.s32.totalorder %s85, %s101
    %p103 = scmp.eq.s32.totalorder %s14, 0
    %p104 = por %p102, %p103
    %p105 = scmp.le.s32.totalorder 1, %s8
    %p106 = scmp.lt.s32.totalorder %s8, 3
    %p107 = pnand %p105, %p106
    %p108 = pneg %p107
    // Predicated region
    $region9: #{_lambda_.1} parent=5 // pred_check
      _
    $region10: #{_lambda_.1} parent=5 // pred_check_branch
      %110 = sbr.rel (%p107) target = $region12
    $region11: #{_lambda_.1} parent=5 // pred_region
      %s111 = ssub.s32 %s8, 1
      // Predicated region
      $region13: #{_lambda_.1} parent=11 // pred_check
        %p112 = pneg %p41
      $region14: #{_lambda_.1} parent=11 // pred_check_branch
        %114 = sbr.rel (%p112) target = $region16
      $region15: #{_lambda_.1} parent=11 // pred_region
        _
      $region16: #{_lambda_.1} parent=11 // pred_fallthru
        _
    $region12: #{_lambda_.1} parent=5 // pred_fallthru
      _
    %p115 = scmp.lt.s32.totalorder %s8, 2
    // Predicated region
    $region17: #{_lambda_.1} parent=5 // pred_check
      %p116 = pneg %p115
    $region18: #{_lambda_.1} parent=5 // pred_check_branch
      %118 = sbr.rel (%p116) target = $region20
    $region19: #{_lambda_.1} parent=5 // pred_region
      // Predicated region
      $region21: #{_lambda_.1} parent=19 // pred_check
        %p119 = pneg %p63
      $region22: #{_lambda_.1} parent=19 // pred_check_branch
        %121 = sbr.rel (%p119) target = $region24
      $region23: #{_lambda_.1} parent=19 // pred_region
        %s122 = smul.u32 2, %s16
        %p123 = scmp.lt.s32.totalorder %s15, 1
        %s124 = scalar_select %p123, %s15, 1
        %p125 = scmp.lt.s32.totalorder %s122, 1
        %s126 = scalar_select %p125, %s122, 1
        %s127 = smul.addr %s124, 2
        %s128 = sadd.s32 %s126, %s127
        %s129 = smul.addr %s128, 4
        %s130 = scalar_lea.vmem %s1, %s129
        %s131 = smul.u32 2, %s16
      $region24: #{_lambda_.1} parent=19 // pred_fallthru
        _
    $region20: #{_lambda_.1} parent=5 // pred_fallthru
      _
    %p132 = scmp.le.s32.totalorder 1, %s8
    %p133 = scmp.lt.s32.totalorder %s8, 3
    %p134 = pnand %p132, %p133
    %p135 = pneg %p134
    // Predicated region
    $region25: #{_lambda_.1} parent=5 // pred_check
      _
    $region26: #{_lambda_.1} parent=5 // pred_check_branch
      %137 = sbr.rel (%p134) target = $region28
    $region27: #{_lambda_.1} parent=5 // pred_region
      %s138 = ssub.s32 %s8, 1
      %p139 = pneg %p41
      %p140 = pneg %p38
      %s141 = smul.u32 2, %s18
      %p142 = scmp.lt.s32.totalorder %s17, 1
      %s143 = scalar_select %p142, %s17, 1
      %p144 = scmp.lt.s32.totalorder %s141, 1
      %s145 = scalar_select %p144, %s141, 1
      %s146 = smul.addr %s143, 2
      %s147 = sadd.s32 %s145, %s146
      %s148 = smul.addr %s147, 4
      %s149 = scalar_lea.vmem %s1, %s148
      %p150 = pneg %p69
      %p151 = pneg %p66
      %p152 = pneg %p97
      %p153 = pneg %p94
      %s154 = smul.u32 2, %s18
      %p155 = scmp.lt.s32.totalorder %s17, 1
      %s156 = scalar_select %p155, %s17, 1
      %p157 = scmp.lt.s32.totalorder %s154, 1
      %s158 = scalar_select %p157, %s154, 1
      %s159 = smul.addr %s156, 32
      %s160 = sadd.s32 %s158, %s159
      %s161 = smul.addr %s160, 8
      %s162 = scalar_lea.vmem %s2, %s161
      %s163 = smul.u32 2, %s18
      %p164 = scmp.lt.s32.totalorder %s17, 1
      %s165 = scalar_select %p164, %s17, 1
      %p166 = scmp.lt.s32.totalorder %s163, 1
      %s167 = scalar_select %p166, %s163, 1
      %s168 = smul.addr %s165, 2
      %s169 = sadd.s32 %s167, %s168
      %s170 = smul.addr %s169, 4
      %s171 = scalar_lea.vmem %s1, %s170
      %s172 = smul.u32 2, %s18
      %s173 = smul.u32 2, %s18
      %p174 = scmp.lt.s32.totalorder %s17, 1
      %s175 = scalar_select %p174, %s17, 1
      %p176 = scmp.lt.s32.totalorder %s173, 1
      %s177 = scalar_select %p176, %s173, 1
      %s178 = smul.addr %s175, 32
      %s179 = sadd.s32 %s177, %s178
      %s180 = smul.addr %s179, 8
      %s181 = scalar_lea.vmem %s2, %s180
      %s182 = smul.u32 2, %s18
      %v183 = vld [vmem:[%s0] sm:$0xff]
      %v184 = vld [vmem:[%s0 + $0x8] sm:$0xff]
      %v185 = vld [vmem:[%s0 + $0x10] sm:$0xff]
      %v186 = vld [vmem:[%s0 + $0x18] sm:$0xff]
      %v187 = vld [vmem:[%s0 + $0x20] sm:$0xff]
      %v188 = vld [vmem:[%s0 + $0x28] sm:$0xff]
      %v189 = vld [vmem:[%s0 + $0x30] sm:$0xff]
      %v190 = vld [vmem:[%s0 + $0x38] sm:$0xff]
      %v191 = vld [vmem:[%s0 + $0x40] sm:$0xff]
      %v192 = vld [vmem:[%s0 + $0x48] sm:$0xff]
      %v193 = vld [vmem:[%s0 + $0x50] sm:$0xff]
      %v194 = vld [vmem:[%s0 + $0x58] sm:$0xff]
      %v195 = vld [vmem:[%s0 + $0x60] sm:$0xff]
      %v196 = vld [vmem:[%s0 + $0x68] sm:$0xff]
      %v197 = vld [vmem:[%s0 + $0x70] sm:$0xff]
      %v198 = vld [vmem:[%s0 + $0x78] sm:$0xff]
      %v199 = vld [vmem:[%s171] sm:$0xff]
      %201 = vst [vmem:[#allocation1] ss:$2 sm:$0xff] %v199
      %v202 = vld.sshfl [vmem:[#allocation1] sm:$0xff pattern:$0x75316420]
      %v203 = vld.sshfl [vmem:[#allocation1 + $0x8] sm:$0xff pattern:$0x75316420]
      %vm204 = vcmask 31744
      %v206 = vsel %vm204, %v183, 0
      %v209 = vsel %vm204, %v184, 0
      %v212 = vsel %vm204, %v185, 0
      %v215 = vsel %vm204, %v186, 0
      %v218 = vsel %vm204, %v187, 0
      %v221 = vsel %vm204, %v188, 0
      %v224 = vsel %vm204, %v189, 0
      %v227 = vsel %vm204, %v190, 0
      %v230 = vsel %vm204, %v191, 0
      %v233 = vsel %vm204, %v192, 0
      %v236 = vsel %vm204, %v193, 0
      %v239 = vsel %vm204, %v194, 0
      %v242 = vsel %vm204, %v195, 0
      %v245 = vsel %vm204, %v196, 0
      %v248 = vsel %vm204, %v197, 0
      %v251 = vsel %vm204, %v198, 0
      %vm253 = vcmask 1043456
      %v254 = vsel %vm253, %v202, 0
      %v256 = vsel %vm253, %v203, 0
      %258 = vmatpush.msra.mxu0 0.0
      %259 = vmatpush.msra.mxu0 0.0
      %260 = vmatpush.msra.mxu0 0.0
      %261 = vmatpush.msra.mxu0 0.0
      %262 = vmatpush.msra.mxu0 0.0
      %263 = vmatpush.msra.mxu0 0.0
      %264 = vmatpush.msra.mxu0 0.0
      %265 = vmatpush.msra.mxu0 0.0
      %266 = vmatpush.msra.mxu0 0.0
      %267 = vmatpush.msra.mxu0 0.0
      %268 = vmatpush.msra.mxu0 0.0
      %269 = vmatpush.msra.mxu0 0.0
      %270 = vmatpush.msra.mxu0 0.0
      %271 = vmatpush.msra.mxu0 0.0
      %272 = vmatpush.msra.mxu0 0.0
      %273 = vmatpush.msra.mxu0 %v254
      %274 = vmatmul.f32.gmra.mxu0 %v206
      %v275 = vpop.f32.mrf.mxu0
      %v276 = vadd.f32 0.0, %v275
      %277 = vmatmul.f32.gmra.mxu0 %v209
      %v278 = vpop.f32.mrf.mxu0
      %v279 = vadd.f32 0.0, %v278
      %280 = vmatmul.f32.gmra.mxu0 %v212
      %v281 = vpop.f32.mrf.mxu0
      %v282 = vadd.f32 0.0, %v281
      %283 = vmatmul.f32.gmra.mxu0 %v215
      %v284 = vpop.f32.mrf.mxu0
      %v285 = vadd.f32 0.0, %v284
      %286 = vmatmul.f32.gmra.mxu0 %v218
      %v287 = vpop.f32.mrf.mxu0
      %v288 = vadd.f32 0.0, %v287
      %289 = vmatmul.f32.gmra.mxu0 %v221
      %v290 = vpop.f32.mrf.mxu0
      %v291 = vadd.f32 0.0, %v290
      %292 = vmatmul.f32.gmra.mxu0 %v224
      %v293 = vpop.f32.mrf.mxu0
      %v294 = vadd.f32 0.0, %v293
      %295 = vmatmul.f32.gmra.mxu0 %v227
      %v296 = vpop.f32.mrf.mxu0
      %v297 = vadd.f32 0.0, %v296
      %298 = vmatmul.f32.gmra.mxu0 %v230
      %v299 = vpop.f32.mrf.mxu0
      %v300 = vadd.f32 0.0, %v299
      %301 = vmatmul.f32.gmra.mxu0 %v233
      %v302 = vpop.f32.mrf.mxu0
      %v303 = vadd.f32 0.0, %v302
      %304 = vmatmul.f32.gmra.mxu0 %v236
      %v305 = vpop.f32.mrf.mxu0
      %v306 = vadd.f32 0.0, %v305
      %307 = vmatmul.f32.gmra.mxu0 %v239
      %v308 = vpop.f32.mrf.mxu0
      %v309 = vadd.f32 0.0, %v308
      %310 = vmatmul.f32.gmra.mxu0 %v242
      %v311 = vpop.f32.mrf.mxu0
      %v312 = vadd.f32 0.0, %v311
      %313 = vmatmul.f32.gmra.mxu0 %v245
      %v314 = vpop.f32.mrf.mxu0
      %v315 = vadd.f32 0.0, %v314
      %316 = vmatmul.f32.gmra.mxu0 %v248
      %v317 = vpop.f32.mrf.mxu0
      %v318 = vadd.f32 0.0, %v317
      %319 = vmatmul.f32.gmra.mxu0 %v251
      %v320 = vpop.f32.mrf.mxu0
      %v321 = vadd.f32 0.0, %v320
      %322 = vdwg.mxu0
      %323 = vmatpush.msra.mxu0 0.0
      %324 = vmatpush.msra.mxu0 0.0
      %325 = vmatpush.msra.mxu0 0.0
      %326 = vmatpush.msra.mxu0 0.0
      %327 = vmatpush.msra.mxu0 0.0
      %328 = vmatpush.msra.mxu0 0.0
      %329 = vmatpush.msra.mxu0 0.0
      %330 = vmatpush.msra.mxu0 0.0
      %331 = vmatpush.msra.mxu0 0.0
      %332 = vmatpush.msra.mxu0 0.0
      %333 = vmatpush.msra.mxu0 0.0
      %334 = vmatpush.msra.mxu0 0.0
      %335 = vmatpush.msra.mxu0 0.0
      %336 = vmatpush.msra.mxu0 0.0
      %337 = vmatpush.msra.mxu0 0.0
      %338 = vmatpush.msra.mxu0 %v256
      %339 = vmatmul.f32.gmra.mxu0 %v206
      %v340 = vpop.f32.mrf.mxu0
      %v341 = vadd.f32 0.0, %v340
      %342 = vmatmul.f32.gmra.mxu0 %v209
      %v343 = vpop.f32.mrf.mxu0
      %v344 = vadd.f32 0.0, %v343
      %345 = vmatmul.f32.gmra.mxu0 %v212
      %v346 = vpop.f32.mrf.mxu0
      %v347 = vadd.f32 0.0, %v346
      %348 = vmatmul.f32.gmra.mxu0 %v215
      %v349 = vpop.f32.mrf.mxu0
      %v350 = vadd.f32 0.0, %v349
      %351 = vmatmul.f32.gmra.mxu0 %v218
      %v352 = vpop.f32.mrf.mxu0
      %v353 = vadd.f32 0.0, %v352
      %354 = vmatmul.f32.gmra.mxu0 %v221
      %v355 = vpop.f32.mrf.mxu0
      %v356 = vadd.f32 0.0, %v355
      %357 = vmatmul.f32.gmra.mxu0 %v224
      %v358 = vpop.f32.mrf.mxu0
      %v359 = vadd.f32 0.0, %v358
      %360 = vmatmul.f32.gmra.mxu0 %v227
      %v361 = vpop.f32.mrf.mxu0
      %v362 = vadd.f32 0.0, %v361
      %363 = vmatmul.f32.gmra.mxu0 %v230
      %v364 = vpop.f32.mrf.mxu0
      %v365 = vadd.f32 0.0, %v364
      %366 = vmatmul.f32.gmra.mxu0 %v233
      %v367 = vpop.f32.mrf.mxu0
      %v368 = vadd.f32 0.0, %v367
      %369 = vmatmul.f32.gmra.mxu0 %v236
      %v370 = vpop.f32.mrf.mxu0
      %v371 = vadd.f32 0.0, %v370
      %372 = vmatmul.f32.gmra.mxu0 %v239
      %v373 = vpop.f32.mrf.mxu0
      %v374 = vadd.f32 0.0, %v373
      %375 = vmatmul.f32.gmra.mxu0 %v242
      %v376 = vpop.f32.mrf.mxu0
      %v377 = vadd.f32 0.0, %v376
      %378 = vmatmul.f32.gmra.mxu0 %v245
      %v379 = vpop.f32.mrf.mxu0
      %v380 = vadd.f32 0.0, %v379
      %381 = vmatmul.f32.gmra.mxu0 %v248
      %v382 = vpop.f32.mrf.mxu0
      %v383 = vadd.f32 0.0, %v382
      %384 = vmatmul.f32.gmra.mxu0 %v251
      %v385 = vpop.f32.mrf.mxu0
      %v386 = vadd.f32 0.0, %v385
      %387 = vdwg.mxu0
      %388 = vst [vmem:[%s181] sm:$0xff] %v276
      %389 = vst [vmem:[%s181 + $0x8] sm:$0xff] %v341
      %390 = vst [vmem:[%s181 + $0x10] sm:$0xff] %v279
      %391 = vst [vmem:[%s181 + $0x18] sm:$0xff] %v344
      %392 = vst [vmem:[%s181 + $0x20] sm:$0xff] %v282
      %393 = vst [vmem:[%s181 + $0x28] sm:$0xff] %v347
      %394 = vst [vmem:[%s181 + $0x30] sm:$0xff] %v285
      %395 = vst [vmem:[%s181 + $0x38] sm:$0xff] %v350
      %396 = vst [vmem:[%s181 + $0x40] sm:$0xff] %v288
      %397 = vst [vmem:[%s181 + $0x48] sm:$0xff] %v353
      %398 = vst [vmem:[%s181 + $0x50] sm:$0xff] %v291
      %399 = vst [vmem:[%s181 + $0x58] sm:$0xff] %v356
      %400 = vst [vmem:[%s181 + $0x60] sm:$0xff] %v294
      %401 = vst [vmem:[%s181 + $0x68] sm:$0xff] %v359
      %402 = vst [vmem:[%s181 + $0x70] sm:$0xff] %v297
      %403 = vst [vmem:[%s181 + $0x78] sm:$0xff] %v362
      %404 = vst [vmem:[%s181 + $0x80] sm:$0xff] %v300
      %405 = vst [vmem:[%s181 + $0x88] sm:$0xff] %v365
      %406 = vst [vmem:[%s181 + $0x90] sm:$0xff] %v303
      %407 = vst [vmem:[%s181 + $0x98] sm:$0xff] %v368
      %408 = vst [vmem:[%s181 + $0xa0] sm:$0xff] %v306
      %409 = vst [vmem:[%s181 + $0xa8] sm:$0xff] %v371
      %410 = vst [vmem:[%s181 + $0xb0] sm:$0xff] %v309
      %411 = vst [vmem:[%s181 + $0xb8] sm:$0xff] %v374
      %412 = vst [vmem:[%s181 + $0xc0] sm:$0xff] %v312
      %413 = vst [vmem:[%s181 + $0xc8] sm:$0xff] %v377
      %414 = vst [vmem:[%s181 + $0xd0] sm:$0xff] %v315
      %415 = vst [vmem:[%s181 + $0xd8] sm:$0xff] %v380
      %416 = vst [vmem:[%s181 + $0xe0] sm:$0xff] %v318
      %417 = vst [vmem:[%s181 + $0xe8] sm:$0xff] %v383
      %418 = vst [vmem:[%s181 + $0xf0] sm:$0xff] %v321
      %419 = vst [vmem:[%s181 + $0xf8] sm:$0xff] %v386
      %s420 = smul.u32 2, %s18
      %p421 = scmp.lt.s32.totalorder %s17, 1
      %s422 = scalar_select %p421, %s17, 1
      %p423 = scmp.lt.s32.totalorder %s420, 1
      %s424 = scalar_select %p423, %s420, 1
      %s425 = smul.addr %s422, 32
      %s426 = sadd.s32 %s424, %s425
      %s427 = smul.addr %s426, 8
      %s428 = scalar_lea.vmem %s2, %s427
      // Predicated region
      $region29: #{_lambda_.1} parent=27 // pred_check
        %p429 = pneg %p94
      $region30: #{_lambda_.1} parent=27 // pred_check_branch
        %431 = sbr.rel (%p429) target = $region32
      $region31: #{_lambda_.1} parent=27 // pred_region
        %s432 = smul.u32 2, %s18
      $region32: #{_lambda_.1} parent=27 // pred_fallthru
        _
    $region28: #{_lambda_.1} parent=5 // pred_fallthru
      _
    %p433 = scmp.le.s32.totalorder 2, %s8
    // Predicated region
    $region33: #{_lambda_.1} parent=5 // pred_check
      %p434 = pneg %p433
    $region34: #{_lambda_.1} parent=5 // pred_check_branch
      %436 = sbr.rel (%p434) target = $region36
    $region35: #{_lambda_.1} parent=5 // pred_region
      %s437 = ssub.s32 %s8, 2
      // Predicated region
      $region37: #{_lambda_.1} parent=35 // pred_check
        %p438 = pneg %p100
      $region38: #{_lambda_.1} parent=35 // pred_check_branch
        %440 = sbr.rel (%p438) target = $region40
      $region39: #{_lambda_.1} parent=35 // pred_region
        %s441 = smul.u32 2, %s20
        %p442 = scmp.lt.s32.totalorder %s19, 1
        %s443 = scalar_select %p442, %s19, 1
        %p444 = scmp.lt.s32.totalorder %s441, 1
        %s445 = scalar_select %p444, %s441, 1
        %s446 = smul.addr %s443, 32
        %s447 = sadd.s32 %s445, %s446
        %s448 = smul.addr %s447, 8
        %s449 = scalar_lea.vmem %s2, %s448
      $region40: #{_lambda_.1} parent=35 // pred_fallthru
        _
    $region36: #{_lambda_.1} parent=5 // pred_fallthru
      _
  $region6: #{_lambda_.1} parent=0 // loop_footer
    %s12 = sadd.s32 1, %s8
  $region7: #{_lambda_.1} parent=0 // loop_footer_branch
    %7 = sbr.rel target = $region3
  $region8: #{_lambda_.1} parent=0 // loop_exit
    _

</llo_original>
